<compile_context>
chip_gen: v7x
topology: tpu7x:2x2x1
jax: 0.10.0
libtpu: 0.0.40
codegen_flags: <defaults>
</compile_context>

<pallas_src>
import jax
import jax.numpy as jnp
from jax.experimental import pallas as pl
from jax.experimental.pallas import tpu as pltpu

_LANES = 128
_SUBLANES = 8


def emg_mlp_kernel(x_ref, w1_ref, b1_ref, w2_ref, b2_ref, o_ref):
    # fc1: x @ w1 + b1, ReLU (bias add fused into the same expression).
    h = jnp.maximum(
        jnp.dot(x_ref[...], w1_ref[...], preferred_element_type=jnp.float32)
        + b1_ref[...],
        0.0,
    )
    # fc2: h @ w2 + b2  (w2/b2 are lane-padded to 128 -> unmasked store).
    y = jnp.dot(h, w2_ref[...], preferred_element_type=jnp.float32) + b2_ref[...]
    o_ref[...] = y.astype(o_ref.dtype)


def _round_up(n, m):
    return ((n + m - 1) // m) * m


def emg_model_forward(x, w1, b1, w2, b2, *, block_b=512):
    """Forward pass of EMGModel.

    x: (B, D_in) f32; w1: (D_in, H); b1: (H,); w2: (H, O); b2: (O,).
    Returns (B, O) f32 logits.
    """
    B, D = x.shape
    H = w1.shape[1]
    O = w2.shape[1]

    # Lane-dense output: pad the output feature dim up to a multiple of 128
    # with zero weight columns / zero biases; slice back after the call.
    O_pad = _round_up(O, _LANES)
    w2p = jnp.pad(w2, ((0, 0), (0, O_pad - O)))
    b1r = b1.reshape(1, H)
    b2r = jnp.pad(b2, (0, O_pad - O)).reshape(1, O_pad)

    if B <= block_b:
        # Small batch: single gridless invocation, everything VMEM-resident.
        Bp = max(_SUBLANES, _round_up(B, _SUBLANES))
        xp = jnp.pad(x, ((0, Bp - B), (0, 0)))
        out = pl.pallas_call(
            emg_mlp_kernel,
            out_shape=jax.ShapeDtypeStruct((Bp, O_pad), jnp.float32),
            in_specs=[pl.BlockSpec(memory_space=pltpu.MemorySpace.VMEM)] * 5,
            out_specs=pl.BlockSpec(memory_space=pltpu.MemorySpace.VMEM),
        )(xp, w1, b1r, w2p, b2r)
        return out[:B, :O]

    # Large batch: tile the batch axis; weights stay resident across the grid.
    Bp = _round_up(B, block_b)
    xp = jnp.pad(x, ((0, Bp - B), (0, 0)))
    out = pl.pallas_call(
        emg_mlp_kernel,
        out_shape=jax.ShapeDtypeStruct((Bp, O_pad), jnp.float32),
        grid=(Bp // block_b,),
        in_specs=[
            pl.BlockSpec((block_b, D), lambda i: (i, 0)),
            pl.BlockSpec((D, H), lambda i: (0, 0)),
            pl.BlockSpec((1, H), lambda i: (0, 0)),
            pl.BlockSpec((H, O_pad), lambda i: (0, 0)),
            pl.BlockSpec((1, O_pad), lambda i: (0, 0)),
        ],
        out_specs=pl.BlockSpec((block_b, O_pad), lambda i: (i, 0)),
        compiler_params=pltpu.CompilerParams(
            dimension_semantics=("parallel",)),  # megacore sharding on v7x
    )(xp, w1, b1r, w2p, b2r)
    return out[:B, :O]


def init_params(key, input_size, hidden_size, output_size):
    """Deterministic init mimicking nn.Linear (uniform ±1/sqrt(fan_in))."""
    k1, k2, k3, k4 = jax.random.split(key, 4)
    lim1 = 1.0 / jnp.sqrt(input_size)
    lim2 = 1.0 / jnp.sqrt(hidden_size)
    w1 = jax.random.uniform(k1, (input_size, hidden_size), jnp.float32, -lim1, lim1)
    b1 = jax.random.uniform(k2, (hidden_size,), jnp.float32, -lim1, lim1)
    w2 = jax.random.uniform(k3, (hidden_size, output_size), jnp.float32, -lim2, lim2)
    b2 = jax.random.uniform(k4, (output_size,), jnp.float32, -lim2, lim2)
    return w1, b1, w2, b2


def _reference(x, w1, b1, w2, b2):
    return jnp.maximum(x @ w1 + b1, 0.0) @ w2 + b2


if __name__ == "__main__":
    # Shapes consistent with the module: hidden_size=64 (from the spec),
    # input_size=16 EMG features, output_size=4 gesture classes.
    input_size, hidden_size, output_size = 16, 64, 4

    key = jax.random.PRNGKey(0)
    kx, kp, kx2 = jax.random.split(key, 3)
    w1, b1, w2, b2 = init_params(kp, input_size, hidden_size, output_size)

    # 1) Small batch -> gridless single-shot path.
    x_small = jax.random.normal(kx, (8, input_size), jnp.float32)
    out_small = jax.block_until_ready(emg_model_forward(x_small, w1, b1, w2, b2))
    ref_small = _reference(x_small, w1, b1, w2, b2)
    assert out_small.shape == (8, output_size)
    assert jnp.allclose(out_small, ref_small, atol=1e-5, rtol=1e-5)

    # 2) Batched path (many EMG windows per call) -> batch-tiled grid with
    #    VMEM-resident weights and a ragged final tile (padded in the wrapper).
    x_big = jax.random.normal(kx2, (260, input_size), jnp.float32)
    out_big = jax.block_until_ready(
        emg_model_forward(x_big, w1, b1, w2, b2, block_b=128))
    ref_big = _reference(x_big, w1, b1, w2, b2)
    assert out_big.shape == (260, output_size)
    assert jnp.allclose(out_big, ref_big, atol=1e-5, rtol=1e-5)

    print("KERNEL_OK")
</pallas_src>

<mosaic_0001>
module attributes {stable_mosaic.version = 11 : i64} {
  func.func @emg_mlp_kernel(%arg0: memref<8x16xf32, #tpu.memory_space<vmem>>, %arg1: memref<16x64xf32, #tpu.memory_space<vmem>>, %arg2: memref<1x64xf32, #tpu.memory_space<vmem>>, %arg3: memref<64x128xf32, #tpu.memory_space<vmem>>, %arg4: memref<1x128xf32, #tpu.memory_space<vmem>>, %arg5: memref<8x128xf32, #tpu.memory_space<vmem>>) attributes {dimension_semantics = [], scalar_prefetch = 0 : i64, scratch_operands = 0 : i64, tpu.core_type = #tpu.core_type<tc>} {
    %c0 = arith.constant 0 : index
    %c0_0 = arith.constant 0 : index
    %0 = vector.load %arg0[%c0, %c0_0] : memref<8x16xf32, #tpu.memory_space<vmem>>, vector<8x16xf32>
    %c0_1 = arith.constant 0 : index
    %c0_2 = arith.constant 0 : index
    %1 = vector.load %arg1[%c0_1, %c0_2] : memref<16x64xf32, #tpu.memory_space<vmem>>, vector<16x64xf32>
    %cst = arith.constant dense<0.000000e+00> : vector<8x64xf32>
    %2 = tpu.matmul %0, %1, %cst {dimension_numbers = #tpu.dot_dimension_numbers<[1], [0], [0], [1], [0, 0, 1, 1], [], []>} : vector<8x16xf32>, vector<16x64xf32>, vector<8x64xf32> -> vector<8x64xf32>
    %c0_3 = arith.constant 0 : index
    %c0_4 = arith.constant 0 : index
    %3 = vector.load %arg2[%c0_3, %c0_4] : memref<1x64xf32, #tpu.memory_space<vmem>>, vector<1x64xf32>
    %4 = vector.broadcast %3 : vector<1x64xf32> to vector<8x64xf32>
    %5 = arith.addf %2, %4 : vector<8x64xf32>
    %cst_5 = arith.constant 0.000000e+00 : f32
    %6 = vector.broadcast %cst_5 : f32 to vector<8x64xf32>
    %7 = arith.maximumf %5, %6 : vector<8x64xf32>
    %c0_6 = arith.constant 0 : index
    %c0_7 = arith.constant 0 : index
    %8 = vector.load %arg3[%c0_6, %c0_7] : memref<64x128xf32, #tpu.memory_space<vmem>>, vector<64x128xf32>
    %cst_8 = arith.constant dense<0.000000e+00> : vector<8x128xf32>
    %9 = tpu.matmul %7, %8, %cst_8 {dimension_numbers = #tpu.dot_dimension_numbers<[1], [0], [0], [1], [0, 0, 1, 1], [], []>} : vector<8x64xf32>, vector<64x128xf32>, vector<8x128xf32> -> vector<8x128xf32>
    %c0_9 = arith.constant 0 : index
    %c0_10 = arith.constant 0 : index
    %10 = vector.load %arg4[%c0_9, %c0_10] : memref<1x128xf32, #tpu.memory_space<vmem>>, vector<1x128xf32>
    %11 = vector.broadcast %10 : vector<1x128xf32> to vector<8x128xf32>
    %12 = arith.addf %9, %11 : vector<8x128xf32>
    %c0_11 = arith.constant 0 : index
    %c0_12 = arith.constant 0 : index
    %13 = vector.load %arg5[%c0_11, %c0_12] : memref<8x128xf32, #tpu.memory_space<vmem>>, vector<8x128xf32>
    tpu.vector_store %arg5[%c0_11, %c0_12], %12 {strides = array<i32>} : memref<8x128xf32, #tpu.memory_space<vmem>>, vector<8x128xf32>,
    return
  }
}

</mosaic_0001>

<llo_original>
// kernel: tpu_custom_call.1
$region0: #{tpu_custom_call.1}
  #allocation0 [shape = 'u32[]', space=smem, size = 0x4, offset = 0x4, fixed_abs, tag = 'smem constant byte address 0x4 - core index']
  #allocation1 [shape = 'u32[144,128]{1,0:T(1,128)}', space=vmem, size = 0x12000, scoped, tag = 'internal scratch']
  %s0 = inlined_call_operand.hbm [shape: f32[8,16], index: 0, kind: input, shape index: {}]
  %s1 = inlined_call_operand.hbm [shape: f32[16,64], index: 1, kind: input, shape index: {}]
  %s2 = inlined_call_operand.vmem [shape: f32[1,64], index: 2, kind: input, shape index: {}]
  %s3 = inlined_call_operand.hbm [shape: f32[64,128], index: 3, kind: input, shape index: {}]
  %s4 = inlined_call_operand.vmem [shape: f32[1,128], index: 4, kind: input, shape index: {}]
  %s5 = inlined_call_operand.hbm [shape: f32[8,128], index: 5, kind: output, shape index: {}]
  %s6 = sld [smem:[#allocation0]]
  $region42: #{tpu_custom_call.1} parent=0
    _
  %s8 = ssub.s32 1, %s6
  %s9 = scalar_select 0, %s8, %s6
  $region1: #{tpu_custom_call.1} parent=0
    #allocation2 [shape = 'u8[4096]{0}', space=vmem, size = 0x1000, scoped, tag = 'input window, operand 0, single buffered']
    #allocation3 [shape = 's32[1]{0}', space=sflag, size = 0x4, scoped, tag = 'scoped memory for tpu_custom_call.1']
    #allocation4 [shape = 's32[1]{0}', space=sflag, size = 0x4, scoped, tag = 'scoped memory for tpu_custom_call.1']
    #allocation5 [shape = 'u8[8192]{0}', space=vmem, size = 0x2000, scoped, tag = 'input window, operand 1, single buffered']
    #allocation6 [shape = 's32[1]{0}', space=sflag, size = 0x4, scoped, tag = 'scoped memory for tpu_custom_call.1']
    #allocation7 [shape = 'u8[32768]{0}', space=vmem, size = 0x8000, scoped, tag = 'input window, operand 3, single buffered']
    #allocation8 [shape = 'u8[4096]{0}', space=vmem, size = 0x1000, scoped, tag = 'output window, operand 0, single buffered']
    %10 = vsyncpa [#allocation3], 0
    %11 = vsyncpa [#allocation6], 0
    %12 = vsyncpa [#allocation4], 0
    // Predicated region
    $region2: #{tpu_custom_call.1} parent=1 // pred_check
      _
    $region3: #{tpu_custom_call.1} parent=1 // pred_check_branch
      %14 = sbr.rel (0) target = $region5
    $region4: #{tpu_custom_call.1} parent=1 // pred_region
      %s16 = ssub.s32 128, 128
      %17 = vsyncadd [#allocation3], %s16
      %s19 = sshll.u32 [#allocation2], 4
      %s20 = int_to_ptr.vmem [resolvable:$true] %s19
      %22 = dma.hbm_to_vmem [thread:$0]  %s0, 128, %s20, [#allocation3]
    $region5: #{tpu_custom_call.1} parent=1 // pred_fallthru
      _
    // Predicated region
    $region6: #{tpu_custom_call.1} parent=1 // pred_check
      _
    $region7: #{tpu_custom_call.1} parent=1 // pred_check_branch
      %24 = sbr.rel (0) target = $region9
    $region8: #{tpu_custom_call.1} parent=1 // pred_region
      %s26 = ssub.s32 256, 256
      %27 = vsyncadd [#allocation6], %s26
      %s28 = sshll.u32 [#allocation5], 4
      %s29 = int_to_ptr.vmem [resolvable:$true] %s28
      %34 = dma.hbm_to_vmem [thread:$0]  %s1, 256, %s29, [#allocation6], 128, 128, 8
    $region9: #{tpu_custom_call.1} parent=1 // pred_fallthru
      _
    // Predicated region
    $region10: #{tpu_custom_call.1} parent=1 // pred_check
      _
    $region11: #{tpu_custom_call.1} parent=1 // pred_check_branch
      %36 = sbr.rel (0) target = $region13
    $region12: #{tpu_custom_call.1} parent=1 // pred_region
      _
    $region13: #{tpu_custom_call.1} parent=1 // pred_fallthru
      _
    // Predicated region
    $region14: #{tpu_custom_call.1} parent=1 // pred_check
      _
    $region15: #{tpu_custom_call.1} parent=1 // pred_check_branch
      %38 = sbr.rel (0) target = $region17
    $region16: #{tpu_custom_call.1} parent=1 // pred_region
      %s40 = ssub.s32 1024, 1024
      %41 = vsyncadd [#allocation6], %s40
      %s42 = sshll.u32 [#allocation7], 4
      %s43 = int_to_ptr.vmem [resolvable:$true] %s42
      %48 = dma.hbm_to_vmem [thread:$0]  %s3, 1024, %s43, [#allocation6], 128, 128, 8
    $region17: #{tpu_custom_call.1} parent=1 // pred_fallthru
      _
    // Predicated region
    $region18: #{tpu_custom_call.1} parent=1 // pred_check
      _
    $region19: #{tpu_custom_call.1} parent=1 // pred_check_branch
      %50 = sbr.rel (0) target = $region21
    $region20: #{tpu_custom_call.1} parent=1 // pred_region
      _
    $region21: #{tpu_custom_call.1} parent=1 // pred_fallthru
      _
    // Predicated region
    $region22: #{tpu_custom_call.1} parent=1 // pred_check
      _
    $region23: #{tpu_custom_call.1} parent=1 // pred_check_branch
      %52 = sbr.rel (0) target = $region25
    $region24: #{tpu_custom_call.1} parent=1 // pred_region
      %53 = dma.done [#allocation3], 128
    $region25: #{tpu_custom_call.1} parent=1 // pred_fallthru
      _
    // Predicated region
    $region26: #{tpu_custom_call.1} parent=1 // pred_check
      _
    $region27: #{tpu_custom_call.1} parent=1 // pred_check_branch
      %55 = sbr.rel (0) target = $region29
    $region28: #{tpu_custom_call.1} parent=1 // pred_region
      %56 = dma.done [#allocation6], 256
    $region29: #{tpu_custom_call.1} parent=1 // pred_fallthru
      _
    // Predicated region
    $region30: #{tpu_custom_call.1} parent=1 // pred_check
      _
    $region31: #{tpu_custom_call.1} parent=1 // pred_check_branch
      %58 = sbr.rel (0) target = $region33
    $region32: #{tpu_custom_call.1} parent=1 // pred_region
      %59 = dma.done [#allocation6], 1024
    $region33: #{tpu_custom_call.1} parent=1 // pred_fallthru
      _
    %v60 = vld [vmem:[#allocation2] sm:$0xff]
    %v61 = vld [vmem:[#allocation5] sm:$0xff]
    %v62 = vld [vmem:[#allocation5 + $0x8] sm:$0xff]
    %v63 = vld [vmem:[%s2] sm:$0x1]
    %v65 = vlaneseq
    %v66 = vshrl.u32 %v65, 7
    %v67 = vsub.s32 0, %v66
    %v68 = vrot.slane %v63, %v67
    %vm70 = vcmask 130048
    %v72 = vsel %vm70, %v60, 0
    %74 = vmatprep.subr.mxu0 0.0
    %75 = vmatpush1.msra.mxu0 %v61
    %76 = vmatprep.subr.mxu0 0.0
    %77 = vmatpush1.msra.mxu0 %v62
    %78 = vmatprep.subr.mxu0 0.0
    %79 = vmatpush1.msra.mxu0 0.0
    %80 = vmatprep.subr.mxu0 0.0
    %81 = vmatpush1.msra.mxu0 0.0
    %82 = vmatprep.subr.mxu0 0.0
    %83 = vmatpush1.msra.mxu0 0.0
    %84 = vmatprep.subr.mxu0 0.0
    %85 = vmatpush1.msra.mxu0 0.0
    %86 = vmatprep.subr.mxu0 0.0
    %87 = vmatpush1.msra.mxu0 0.0
    %88 = vmatprep.subr.mxu0 0.0
    %89 = vmatpush1.msra.mxu0 0.0
    %90 = vmatprep.subr.mxu0 0.0
    %91 = vmatpush1.msra.mxu0 0.0
    %92 = vmatprep.subr.mxu0 0.0
    %93 = vmatpush1.msra.mxu0 0.0
    %94 = vmatprep.subr.mxu0 0.0
    %95 = vmatpush1.msra.mxu0 0.0
    %96 = vmatprep.subr.mxu0 0.0
    %97 = vmatpush1.msra.mxu0 0.0
    %98 = vmatprep.subr.mxu0 0.0
    %99 = vmatpush1.msra.mxu0 0.0
    %100 = vmatprep.subr.mxu0 0.0
    %101 = vmatpush1.msra.mxu0 0.0
    %102 = vmatprep.subr.mxu0 0.0
    %103 = vmatpush1.msra.mxu0 0.0
    %104 = vmatprep.subr.mxu0 0.0
    %105 = vmatpush1.msra.mxu0 0.0
    %106 = vmatprep.subr.mxu0 0.0
    %107 = vmatpush1.msra.mxu0 0.0
    %108 = vmatprep.subr.mxu0 0.0
    %109 = vmatpush1.msra.mxu0 0.0
    %110 = vmatprep.subr.mxu0 0.0
    %111 = vmatpush1.msra.mxu0 0.0
    %112 = vmatprep.subr.mxu0 0.0
    %113 = vmatpush1.msra.mxu0 0.0
    %114 = vmatprep.subr.mxu0 0.0
    %115 = vmatpush1.msra.mxu0 0.0
    %116 = vmatprep.subr.mxu0 0.0
    %117 = vmatpush1.msra.mxu0 0.0
    %118 = vmatprep.subr.mxu0 0.0
    %119 = vmatpush1.msra.mxu0 0.0
    %120 = vmatprep.subr.mxu0 0.0
    %121 = vmatpush1.msra.mxu0 0.0
    %122 = vmatprep.subr.mxu0 0.0
    %123 = vmatpush1.msra.mxu0 0.0
    %124 = vmatprep.subr.mxu0 0.0
    %125 = vmatpush1.msra.mxu0 0.0
    %126 = vmatprep.subr.mxu0 0.0
    %127 = vmatpush1.msra.mxu0 0.0
    %128 = vmatprep.subr.mxu0 0.0
    %129 = vmatpush1.msra.mxu0 0.0
    %130 = vmatprep.subr.mxu0 0.0
    %131 = vmatpush1.msra.mxu0 0.0
    %132 = vmatprep.subr.mxu0 0.0
    %133 = vmatpush1.msra.mxu0 0.0
    %134 = vmatprep.subr.mxu0 0.0
    %135 = vmatpush1.msra.mxu0 0.0
    %136 = vmatprep.subr.mxu0 0.0
    %137 = vmatpush1.msra.mxu0 0.0
    %138 = vmatprep.mubr.f32.mxu0 0.0
    %139 = vmatmul.mubr.f32.gmra.mrb[0].mxu0 %v72
    %v140 = vpop.f32.mrb[0].mxu0
    %v141 = vadd.f32 %v68, %v140
    %v142 = vpop.f32.mrb[0].mxu0
    %143 = vdwg.mxu0
    %v144 = vmax.f32 %v141, 0.0
    %v145 = vld [vmem:[#allocation7] sm:$0xff]
    %v146 = vld [vmem:[#allocation7 + $0x8] sm:$0xff]
    %v147 = vld [vmem:[#allocation7 + $0x10] sm:$0xff]
    %v148 = vld [vmem:[#allocation7 + $0x18] sm:$0xff]
    %v149 = vld [vmem:[#allocation7 + $0x20] sm:$0xff]
    %v150 = vld [vmem:[#allocation7 + $0x28] sm:$0xff]
    %v151 = vld [vmem:[#allocation7 + $0x30] sm:$0xff]
    %v152 = vld [vmem:[#allocation7 + $0x38] sm:$0xff]
    %v153 = vld [vmem:[%s4] sm:$0x1]
    %v155 = vlaneseq
    %v156 = vshrl.u32 %v155, 7
    %v157 = vsub.s32 0, %v156
    %v158 = vrot.slane %v153, %v157
    %vm160 = vcmask 523264
    %v162 = vsel %vm160, %v144, 0
    %164 = vmatprep.subr.mxu0 0.0
    %165 = vmatpush1.msra.mxu0 %v145
    %166 = vmatprep.subr.mxu0 0.0
    %167 = vmatpush1.msra.mxu0 %v146
    %168 = vmatprep.subr.mxu0 0.0
    %169 = vmatpush1.msra.mxu0 %v147
    %170 = vmatprep.subr.mxu0 0.0
    %171 = vmatpush1.msra.mxu0 %v148
    %172 = vmatprep.subr.mxu0 0.0
    %173 = vmatpush1.msra.mxu0 %v149
    %174 = vmatprep.subr.mxu0 0.0
    %175 = vmatpush1.msra.mxu0 %v150
    %176 = vmatprep.subr.mxu0 0.0
    %177 = vmatpush1.msra.mxu0 %v151
    %178 = vmatprep.subr.mxu0 0.0
    %179 = vmatpush1.msra.mxu0 %v152
    %180 = vmatprep.subr.mxu0 0.0
    %181 = vmatpush1.msra.mxu0 0.0
    %182 = vmatprep.subr.mxu0 0.0
    %183 = vmatpush1.msra.mxu0 0.0
    %184 = vmatprep.subr.mxu0 0.0
    %185 = vmatpush1.msra.mxu0 0.0
    %186 = vmatprep.subr.mxu0 0.0
    %187 = vmatpush1.msra.mxu0 0.0
    %188 = vmatprep.subr.mxu0 0.0
    %189 = vmatpush1.msra.mxu0 0.0
    %190 = vmatprep.subr.mxu0 0.0
    %191 = vmatpush1.msra.mxu0 0.0
    %192 = vmatprep.subr.mxu0 0.0
    %193 = vmatpush1.msra.mxu0 0.0
    %194 = vmatprep.subr.mxu0 0.0
    %195 = vmatpush1.msra.mxu0 0.0
    %196 = vmatprep.subr.mxu0 0.0
    %197 = vmatpush1.msra.mxu0 0.0
    %198 = vmatprep.subr.mxu0 0.0
    %199 = vmatpush1.msra.mxu0 0.0
    %200 = vmatprep.subr.mxu0 0.0
    %201 = vmatpush1.msra.mxu0 0.0
    %202 = vmatprep.subr.mxu0 0.0
    %203 = vmatpush1.msra.mxu0 0.0
    %204 = vmatprep.subr.mxu0 0.0
    %205 = vmatpush1.msra.mxu0 0.0
    %206 = vmatprep.subr.mxu0 0.0
    %207 = vmatpush1.msra.mxu0 0.0
    %208 = vmatprep.subr.mxu0 0.0
    %209 = vmatpush1.msra.mxu0 0.0
    %210 = vmatprep.subr.mxu0 0.0
    %211 = vmatpush1.msra.mxu0 0.0
    %212 = vmatprep.subr.mxu0 0.0
    %213 = vmatpush1.msra.mxu0 0.0
    %214 = vmatprep.subr.mxu0 0.0
    %215 = vmatpush1.msra.mxu0 0.0
    %216 = vmatprep.subr.mxu0 0.0
    %217 = vmatpush1.msra.mxu0 0.0
    %218 = vmatprep.subr.mxu0 0.0
    %219 = vmatpush1.msra.mxu0 0.0
    %220 = vmatprep.subr.mxu0 0.0
    %221 = vmatpush1.msra.mxu0 0.0
    %222 = vmatprep.subr.mxu0 0.0
    %223 = vmatpush1.msra.mxu0 0.0
    %224 = vmatprep.subr.mxu0 0.0
    %225 = vmatpush1.msra.mxu0 0.0
    %226 = vmatprep.subr.mxu0 0.0
    %227 = vmatpush1.msra.mxu0 0.0
    %228 = vmatprep.mubr.f32.mxu0 0.0
    %229 = vmatmul.mubr.f32.gmra.mrb[0].mxu0 %v162
    %v230 = vpop.f32.mrb[0].mxu0
    %v231 = vadd.f32 %v158, %v230
    %v232 = vpop.f32.mrb[0].mxu0
    %233 = vdwg.mxu0
    %234 = vst [vmem:[#allocation8] sm:$0xff] %v231
    // Predicated region
    $region34: #{tpu_custom_call.1} parent=1 // pred_check
      _
    $region35: #{tpu_custom_call.1} parent=1 // pred_check_branch
      %236 = sbr.rel (0) target = $region37
    $region36: #{tpu_custom_call.1} parent=1 // pred_region
      %s238 = ssub.s32 128, 128
      %239 = vsyncadd [#allocation4], %s238
      %s241 = sshll.u32 [#allocation8], 4
      %s242 = int_to_ptr.vmem [resolvable:$true] %s241
      %244 = dma.vmem_to_hbm [thread:$0]  %s242, 128, %s5, [#allocation4]
    $region37: #{tpu_custom_call.1} parent=1 // pred_fallthru
      _
    // Predicated region
    $region38: #{tpu_custom_call.1} parent=1 // pred_check
      _
    $region39: #{tpu_custom_call.1} parent=1 // pred_check_branch
      %246 = sbr.rel (0) target = $region41
    $region40: #{tpu_custom_call.1} parent=1 // pred_region
      %247 = dma.done [#allocation4], 128
    $region41: #{tpu_custom_call.1} parent=1 // pred_fallthru
      _
    %248 = vsyncpa [#allocation3], 1
    %249 = vsyncpa [#allocation6], 1
    %250 = vsyncpa [#allocation4], 1

</llo_original>
